<compile_context>
chip_gen: v6e
topology: v6e:2x2x1
jax: 0.10.0
libtpu: 0.0.40
codegen_flags: <defaults>
</compile_context>

<pallas_src>
import functools
import math

import jax
import jax.numpy as jnp
from jax import lax
from jax.experimental import pallas as pl
from jax.experimental.pallas import tpu as pltpu


# --------------------------- generation-aware sizing ----------------------- #
@functools.lru_cache(maxsize=None)
def _vmem_limit_bytes():
    """~3/4 of physical VMEM: 48 MiB on v7x, 96 MiB on v5e/v6e."""
    try:
        cap = pltpu.get_tpu_info().vmem_capacity_bytes
    except Exception:
        cap = 64 * 1024 * 1024  # conservative fallback (v7x physical)
    return max(32 * 1024 * 1024, min(int(cap) * 3 // 4, 96 * 1024 * 1024))


def _pick_tile(dim, target, align):
    """Largest tile <= target that is a multiple of `align` and divides `dim`;
    falls back to the full dim (a full-extent block is always legal)."""
    if dim <= target:
        return dim
    if dim % align:
        return dim
    t = (target // align) * align
    while t >= align:
        if dim % t == 0:
            return t
        t -= align
    return dim


# ----------------------------- linear kernels ------------------------------ #
def _linear_kernel_acc_out(x_ref, w_ref, b_ref, o_ref):
    # f32 output block is resident across the K grid axis: accumulate in place.
    @pl.when(pl.program_id(2) == 0)
    def _init():
        o_ref[...] = jnp.broadcast_to(b_ref[...].astype(jnp.float32),
                                      o_ref.shape)

    o_ref[...] += jnp.dot(x_ref[...], w_ref[...],
                          preferred_element_type=jnp.float32)


def _linear_kernel_scratch(x_ref, w_ref, b_ref, o_ref, acc_ref):
    # Non-f32 outputs: accumulate in an f32 VMEM scratch, cast at finalize.
    @pl.when(pl.program_id(2) == 0)
    def _init():
        acc_ref[...] = jnp.broadcast_to(b_ref[...].astype(jnp.float32),
                                        acc_ref.shape)

    acc_ref[...] += jnp.dot(x_ref[...], w_ref[...],
                            preferred_element_type=jnp.float32)

    @pl.when(pl.program_id(2) == pl.num_programs(2) - 1)
    def _finalize():
        o_ref[...] = acc_ref[...].astype(o_ref.dtype)


def linear_pallas(x, w, b, *, tm=512, tn=512, tk=1024):
    """x: (M, K), w: (K, N), b: (N,) -> (M, N), tiled + pipelined."""
    M, K = x.shape
    K2, N = w.shape
    assert K == K2
    # Keep the M ("parallel") grid extent >= 2 so v7x's 2 TCs both get work.
    if M >= 16:
        tm = min(tm, M // 2)
    tm = _pick_tile(M, tm, 8)
    tn = _pick_tile(N, tn, 128)
    tk = _pick_tile(K, tk, 128)
    grid = (M // tm, N // tn, K // tk)

    out_dtype = x.dtype
    if out_dtype == jnp.float32:
        kernel = _linear_kernel_acc_out
        scratch = []
    else:
        kernel = _linear_kernel_scratch
        scratch = [pltpu.VMEM((tm, tn), jnp.float32)]

    return pl.pallas_call(
        kernel,
        out_shape=jax.ShapeDtypeStruct((M, N), out_dtype),
        grid=grid,
        in_specs=[
            pl.BlockSpec((tm, tk), lambda i, j, k: (i, k)),
            pl.BlockSpec((tk, tn), lambda i, j, k: (k, j)),
            pl.BlockSpec((1, tn), lambda i, j, k: (0, j)),
        ],
        out_specs=pl.BlockSpec((tm, tn), lambda i, j, k: (i, j)),
        scratch_shapes=scratch,
        compiler_params=pltpu.CompilerParams(
            dimension_semantics=("parallel", "parallel", "arbitrary"),
            vmem_limit_bytes=_vmem_limit_bytes()),
    )(x, w, b.reshape(1, N))


# --------------------------- attention kernel ------------------------------ #
def _flash_attention_kernel(q_ref, k_ref, v_ref, o_ref,
                            m_ref, l_ref, acc_ref,
                            *, num_heads, d_k):
    # q_ref/o_ref: (1, tq, D), k_ref/v_ref: (1, tkv, D)
    # m_ref/l_ref: (H, tq, 1) f32, acc_ref: (tq, D) f32; KV axis = grid dim 2.
    # 1/sqrt(d_k) is pre-folded into Wq, so Q arrives pre-scaled.
    ki = pl.program_id(2)
    tq = acc_ref.shape[0]

    @pl.when(ki == 0)
    def _init():
        m_ref[...] = jnp.full_like(m_ref, -jnp.inf)
        l_ref[...] = jnp.zeros_like(l_ref)
        acc_ref[...] = jnp.zeros_like(acc_ref)

    pv_parts = []
    alpha_parts = []
    # Per-head score / softmax / PV in registers; head loop is unrolled
    # (small H).  Per-head slices are read straight from the refs.
    for h in range(num_heads):
        sl = slice(h * d_k, (h + 1) * d_k)
        q_h = q_ref[0, :, sl]          # (tq, d_k), already scaled
        k_h = k_ref[0, :, sl]          # (tkv, d_k)
        v_h = v_ref[0, :, sl]          # (tkv, d_k)

        # QK^T without materializing a transpose of K: contract on d_k.
        s = lax.dot_general(q_h, k_h, (((1,), (1,)), ((), ())),
                            preferred_element_type=jnp.float32)   # (tq, tkv)

        m_prev = m_ref[h]                                          # (tq, 1)
        m_new = jnp.maximum(m_prev, s.max(axis=-1, keepdims=True))
        alpha = jnp.exp(m_prev - m_new)                            # (tq, 1)
        p = jnp.exp(s - m_new)                                     # (tq, tkv)

        l_ref[h] = alpha * l_ref[h] + p.sum(axis=-1, keepdims=True)
        m_ref[h] = m_new

        pv_parts.append(jnp.dot(p.astype(v_h.dtype), v_h,
                                preferred_element_type=jnp.float32))
        alpha_parts.append(jnp.broadcast_to(alpha, (tq, d_k)))

    # ONE lane-dense (tq, D) read-modify-write of the accumulator per KV step.
    pv_full = jnp.concatenate(pv_parts, axis=-1)           # (tq, D)
    alpha_full = jnp.concatenate(alpha_parts, axis=-1)      # (tq, D)
    acc_ref[...] = alpha_full * acc_ref[...] + pv_full

    @pl.when(ki == pl.num_programs(2) - 1)
    def _finalize():
        inv_full = jnp.concatenate(
            [jnp.broadcast_to(pl.reciprocal(l_ref[h], approx=True), (tq, d_k))
             for h in range(num_heads)], axis=-1)           # (tq, D)
        # single lane-dense (tq, D) store
        o_ref[0] = (acc_ref[...] * inv_full).astype(o_ref.dtype)


def _attention_tiles(S, D, B, itemsize, vmem_budget, tq_target, tkv_target):
    """Pick (tq, tkv) that divide S and whose double-buffered blocks plus the
    f32 accumulator fit within the VMEM budget (re-derived per generation)."""
    if B == 1 and S >= 16:
        tq_target = min(tq_target, S // 2)   # keep parallel extent >= 2 (v7x)
    tq = _pick_tile(S, tq_target, 8)
    tkv = _pick_tile(S, tkv_target, 8)

    def vmem_bytes(a, b):
        # 2x-buffered (Q + O) blocks + 2x-buffered (K + V) blocks + f32 acc.
        return (2 * 2 * a * D + 2 * 2 * b * D) * itemsize + a * D * 4

    while vmem_bytes(tq, tkv) > vmem_budget:
        cand_q = _pick_tile(S, max(8, tq // 2), 8)
        cand_kv = _pick_tile(S, max(8, tkv // 2), 8)
        if tq >= tkv and cand_q < tq:
            tq = cand_q
        elif cand_kv < tkv:
            tkv = cand_kv
        elif cand_q < tq:
            tq = cand_q
        else:
            break
    return tq, tkv


def attention_pallas(q_arr, k_arr, v_arr, col_blocks, *, B, S, D, num_heads,
                     out_dtype, tq=512, tkv=256):
    """Scaled dot-product attention over all heads, (B, S, D) layout.

    q_arr/k_arr/v_arr may be the same (B, S, n*D) array; `col_blocks` gives
    the D-wide column-block index of Q / K / V inside each array's last axis.
    The 1/sqrt(d_k) scale must already be folded into the Q projection.
    """
    d_k = D // num_heads
    vmem_budget = int(_vmem_limit_bytes() * 0.9)
    tq, tkv = _attention_tiles(S, D, B, jnp.dtype(q_arr.dtype).itemsize,
                               vmem_budget, tq, tkv)
    grid = (B, S // tq, S // tkv)
    qb, kb, vb = col_blocks

    kern = functools.partial(_flash_attention_kernel,
                             num_heads=num_heads, d_k=d_k)
    return pl.pallas_call(
        kern,
        out_shape=jax.ShapeDtypeStruct((B, S, D), out_dtype),
        grid=grid,
        in_specs=[
            pl.BlockSpec((1, tq, D), lambda b, qi, ki: (b, qi, qb)),
            pl.BlockSpec((1, tkv, D), lambda b, qi, ki: (b, ki, kb)),
            pl.BlockSpec((1, tkv, D), lambda b, qi, ki: (b, ki, vb)),
        ],
        out_specs=pl.BlockSpec((1, tq, D), lambda b, qi, ki: (b, qi, 0)),
        scratch_shapes=[
            pltpu.VMEM((num_heads, tq, 1), jnp.float32),   # running max
            pltpu.VMEM((num_heads, tq, 1), jnp.float32),   # running sum
            pltpu.VMEM((tq, D), jnp.float32),              # output accumulator
        ],
        compiler_params=pltpu.CompilerParams(
            dimension_semantics=("parallel", "parallel", "arbitrary"),
            vmem_limit_bytes=_vmem_limit_bytes()),
    )(q_arr, k_arr, v_arr)


# ----------------------------- parameter prep ------------------------------ #
def prepare_params(params, h):
    """One-time prep: fuse [Wq|Wk|Wv] / [bq|bk|bv] and fold 1/sqrt(d_k)
    into the Q projection.  Call once; reuse across forward passes."""
    d_model = params["wq"].shape[0]
    d_k = d_model // h
    scale = 1.0 / math.sqrt(d_k)
    wq_s = params["wq"] * scale
    bq_s = params["bq"] * scale
    prepared = dict(params)
    prepared["wq_s"] = wq_s
    prepared["bq_s"] = bq_s
    prepared["w_qkv"] = jnp.concatenate([wq_s, params["wk"], params["wv"]],
                                        axis=1)              # (D, 3D)
    prepared["b_qkv"] = jnp.concatenate([bq_s, params["bk"], params["bv"]])
    return prepared


# --------------------------- full module forward --------------------------- #
def multi_head_attention_forward(params, query, key, value, h):
    """Mirrors MultiHeadAttention.forward with mask=None, dropout=identity.

    query/key/value: (B, S, d_model).  `params` should come from
    prepare_params (it is prepared lazily otherwise).
    """
    if "w_qkv" not in params:
        params = prepare_params(params, h)

    B, S, D = query.shape
    dtype = query.dtype

    # Fused QKV projection when self-attention (one HBM read of x).
    fused = (query is key) and (key is value) and (D % 128 == 0)
    if fused:
        qkv = linear_pallas(query.reshape(B * S, D),
                            params["w_qkv"], params["b_qkv"])
        qkv = qkv.reshape(B, S, 3 * D)
        x = attention_pallas(qkv, qkv, qkv, (0, 1, 2),
                             B=B, S=S, D=D, num_heads=h, out_dtype=dtype)
    else:
        qp = linear_pallas(query.reshape(B * S, D),
                           params["wq_s"], params["bq_s"]).reshape(B, S, D)
        kp = linear_pallas(key.reshape(B * S, D),
                           params["wk"], params["bk"]).reshape(B, S, D)
        vp = linear_pallas(value.reshape(B * S, D),
                           params["wv"], params["bv"]).reshape(B, S, D)
        x = attention_pallas(qp, kp, vp, (0, 0, 0),
                             B=B, S=S, D=D, num_heads=h, out_dtype=dtype)

    out = linear_pallas(x.reshape(B * S, D), params["wo"], params["bo"])
    return out.reshape(B, S, D)


# ----------------------------- parameter init ------------------------------ #
def init_params(key, d_model):
    """Deterministic init of the 4 nn.Linear(d_model, d_model) layers.

    Weights are stored already transposed to (in, out) so kernels compute
    x @ W + b (equivalent to torch's x @ W_t.T + b).
    """
    ks = jax.random.split(key, 8)
    bound = 1.0 / (d_model ** 0.5)

    def u(k, shape):
        return jax.random.uniform(k, shape, jnp.float32, -bound, bound)

    return {
        "wq": u(ks[0], (d_model, d_model)), "bq": u(ks[1], (d_model,)),
        "wk": u(ks[2], (d_model, d_model)), "bk": u(ks[3], (d_model,)),
        "wv": u(ks[4], (d_model, d_model)), "bv": u(ks[5], (d_model,)),
        "wo": u(ks[6], (d_model, d_model)), "bo": u(ks[7], (d_model,)),
    }


# ------------------------------ reference (JAX) ----------------------------- #
def _reference(params, query, key, value, h):
    B, S, D = query.shape
    d_k = D // h

    def proj(x, w, b):
        return (x.reshape(B * S, D) @ w + b).reshape(B, S, h, d_k).transpose(0, 2, 1, 3)

    q = proj(query, params["wq"], params["bq"])
    k = proj(key, params["wk"], params["bk"])
    v = proj(value, params["wv"], params["bv"])
    scores = jnp.einsum("bhqd,bhkd->bhqk", q, k) / (d_k ** 0.5)
    p = jax.nn.softmax(scores, axis=-1)
    x = jnp.einsum("bhqk,bhkd->bhqd", p, v).transpose(0, 2, 1, 3).reshape(B * S, D)
    return (x @ params["wo"] + params["bo"]).reshape(B, S, D)


if __name__ == "__main__":
    B, S, D, H = 2, 16, 128, 4   # batch, seq, d_model, heads  (d_k = 32)

    root = jax.random.PRNGKey(0)
    kp, kx, kk, kv = jax.random.split(root, 4)
    base_params = init_params(kp, D)
    params = prepare_params(base_params, H)   # one-time fuse + scale fold

    # Self-attention (fused QKV path).
    x_in = jax.random.normal(kx, (B, S, D), jnp.float32)
    out = multi_head_attention_forward(params, x_in, x_in, x_in, H)
    out = jax.block_until_ready(out)
    ref = _reference(base_params, x_in, x_in, x_in, H)
    assert out.shape == (B, S, D)
    assert jnp.allclose(out, ref, atol=5e-3, rtol=5e-3), (
        f"self-attn max err {jnp.max(jnp.abs(out - ref))}")

    # Cross-attention (separate q/k/v path) to cover the general module semantics.
    key_in = jax.random.normal(kk, (B, S, D), jnp.float32)
    val_in = jax.random.normal(kv, (B, S, D), jnp.float32)
    out2 = multi_head_attention_forward(params, x_in, key_in, val_in, H)
    out2 = jax.block_until_ready(out2)
    ref2 = _reference(base_params, x_in, key_in, val_in, H)
    assert jnp.allclose(out2, ref2, atol=5e-3, rtol=5e-3), (
        f"cross-attn max err {jnp.max(jnp.abs(out2 - ref2))}")

    print("KERNEL_OK")
</pallas_src>

<mosaic_0001>
module attributes {stable_mosaic.version = 11 : i64} {
  func.func @_linear_kernel_acc_out(%arg0: i32, %arg1: i32, %arg2: i32, %arg3: memref<16x128xf32, #tpu.memory_space<vmem>>, %arg4: memref<128x384xf32, #tpu.memory_space<vmem>>, %arg5: memref<1x384xf32, #tpu.memory_space<vmem>>, %arg6: memref<16x384xf32, #tpu.memory_space<vmem>>) attributes {dimension_semantics = [#tpu.dimension_semantics<parallel>, #tpu.dimension_semantics<parallel>, #tpu.dimension_semantics<arbitrary>], iteration_bounds = array<i64: 2, 1, 1>, scalar_prefetch = 0 : i64, scratch_operands = 0 : i64, tpu.core_type = #tpu.core_type<tc>, window_params = [{transform_indices = @transform_0, window_bounds = array<i64: 16, 128>}, {transform_indices = @transform_1, window_bounds = array<i64: 128, 384>}, {transform_indices = @transform_2, window_bounds = array<i64: 1, 384>}, {transform_indices = @transform_3, window_bounds = array<i64: 16, 384>}]} {
    %c0_i32 = arith.constant 0 : i32
    %0 = arith.cmpi eq, %arg2, %c0_i32 : i32
    %1 = arith.extui %0 : i1 to i32
    %c0_i32_0 = arith.constant 0 : i32
    %2 = arith.cmpi ne, %1, %c0_i32_0 : i32
    scf.if %2 {
      %c0_8 = arith.constant 0 : index
      %c0_9 = arith.constant 0 : index
      %9 = vector.load %arg5[%c0_8, %c0_9] : memref<1x384xf32, #tpu.memory_space<vmem>>, vector<1x384xf32>
      %10 = vector.shape_cast %9 : vector<1x384xf32> to vector<1x384xf32>
      %11 = vector.broadcast %10 : vector<1x384xf32> to vector<16x384xf32>
      %c0_10 = arith.constant 0 : index
      %c0_11 = arith.constant 0 : index
      %12 = vector.load %arg6[%c0_10, %c0_11] : memref<16x384xf32, #tpu.memory_space<vmem>>, vector<16x384xf32>
      tpu.vector_store %arg6[%c0_10, %c0_11], %11 {strides = array<i32>} : memref<16x384xf32, #tpu.memory_space<vmem>>, vector<16x384xf32>,
    } else {
    }
    %c0 = arith.constant 0 : index
    %c0_1 = arith.constant 0 : index
    %3 = vector.load %arg6[%c0, %c0_1] : memref<16x384xf32, #tpu.memory_space<vmem>>, vector<16x384xf32>
    %c0_2 = arith.constant 0 : index
    %c0_3 = arith.constant 0 : index
    %4 = vector.load %arg3[%c0_2, %c0_3] : memref<16x128xf32, #tpu.memory_space<vmem>>, vector<16x128xf32>
    %c0_4 = arith.constant 0 : index
    %c0_5 = arith.constant 0 : index
    %5 = vector.load %arg4[%c0_4, %c0_5] : memref<128x384xf32, #tpu.memory_space<vmem>>, vector<128x384xf32>
    %cst = arith.constant dense<0.000000e+00> : vector<16x384xf32>
    %6 = tpu.matmul %4, %5, %cst {dimension_numbers = #tpu.dot_dimension_numbers<[1], [0], [0], [1], [0, 0, 1, 1], [], []>} : vector<16x128xf32>, vector<128x384xf32>, vector<16x384xf32> -> vector<16x384xf32>
    %7 = arith.addf %3, %6 : vector<16x384xf32>
    %c0_6 = arith.constant 0 : index
    %c0_7 = arith.constant 0 : index
    %8 = vector.load %arg6[%c0_6, %c0_7] : memref<16x384xf32, #tpu.memory_space<vmem>>, vector<16x384xf32>
    tpu.vector_store %arg6[%c0_6, %c0_7], %7 {strides = array<i32>} : memref<16x384xf32, #tpu.memory_space<vmem>>, vector<16x384xf32>,
    return
  }
  func.func @transform_0(%arg0: i32, %arg1: i32, %arg2: i32) -> (i32, i32) {
    %c0_i32 = arith.constant 0 : i32
    return %arg0, %arg2 : i32, i32
  }
  func.func @transform_1(%arg0: i32, %arg1: i32, %arg2: i32) -> (i32, i32) {
    %c0_i32 = arith.constant 0 : i32
    return %arg2, %arg1 : i32, i32
  }
  func.func @transform_2(%arg0: i32, %arg1: i32, %arg2: i32) -> (i32, i32) {
    %c0_i32 = arith.constant 0 : i32
    %c0_i32_0 = arith.constant 0 : i32
    return %c0_i32, %arg1 : i32, i32
  }
  func.func @transform_3(%arg0: i32, %arg1: i32, %arg2: i32) -> (i32, i32) {
    %c0_i32 = arith.constant 0 : i32
    return %arg0, %arg1 : i32, i32
  }
}

</mosaic_0001>

<llo_original>
// kernel: tpu_custom_call.1
$region0: #{tpu_custom_call.1}
  #allocation0 [shape = 'u32[]', space=smem, size = 0x4, offset = 0x4, fixed_abs, tag = 'smem constant byte address 0x4 - core index']
  #allocation1 [shape = 'u32[144,128]{1,0:T(1,128)}', space=vmem, size = 0x12000, scoped, tag = 'internal scratch']
  %s0 = inlined_call_operand.hbm [shape: f32[32,128], index: 0, kind: input, shape index: {}]
  %s1 = inlined_call_operand.hbm [shape: f32[128,384], index: 1, kind: input, shape index: {}]
  %s2 = inlined_call_operand.vmem [shape: f32[1,384], index: 2, kind: input, shape index: {}]
  %s3 = inlined_call_operand.hbm [shape: f32[32,384], index: 3, kind: output, shape index: {}]
  %s4 = sld [smem:[#allocation0]]
  $region57: #{tpu_custom_call.1} parent=0
    _
  %s6 = ssub.s32 1, %s4
  %s7 = scalar_select 0, %s6, %s4
  $region1: #{tpu_custom_call.1} parent=0
    #allocation2 [shape = 'u8[16384]{0}', space=vmem, size = 0x4000, scoped, tag = 'input window, operand 0']
    #allocation3 [shape = 's32[2]{0}', space=sflag, size = 0x8, scoped, tag = 'scoped memory for tpu_custom_call.1']
    #allocation4 [shape = 's32[2]{0}', space=sflag, size = 0x8, scoped, tag = 'scoped memory for tpu_custom_call.1']
    #allocation5 [shape = 'u8[196608]{0}', space=vmem, size = 0x30000, scoped, tag = 'input window, operand 1, single buffered']
    #allocation6 [shape = 's32[1]{0}', space=sflag, size = 0x4, scoped, tag = 'scoped memory for tpu_custom_call.1']
    #allocation7 [shape = 'u8[49152]{0}', space=vmem, size = 0xc000, scoped, tag = 'output window, operand 0']
    %8 = vsyncpa [#allocation3], 0
    %s9 = scalar_lea.sflag [#allocation3], 1
    %10 = vsyncpa %s9, 0
    %11 = vsyncpa [#allocation6], 0
    %12 = vsyncpa [#allocation4], 0
    %s13 = scalar_lea.sflag [#allocation4], 1
    %14 = vsyncpa %s13, 0
    loop: start=0, step=1, limit=4
    $region2: #{tpu_custom_call.1} parent=1 // loop_pre_header
      _
    $region3: #{tpu_custom_call.1} parent=1 // loop_header
      %s16 = sphi 0, %s20
      %p17 = scmp.ge.s32.totalorder %s16, 4
      %s23 = sphi 0, %s42
      %s24 = sphi 0, %s38
      %s25 = sphi 0, %s34
      %s26 = sphi 0, %s23
      %s27 = sphi 0, %s24
      %s28 = sphi 0, %s25
      %s29 = sphi 0, %s26
      %s30 = sphi 0, %s27
      %s31 = sphi 0, %s28
      %s47 = sphi 0, %s49
      %s50 = sphi 0, %s47
      %s51 = sphi 0, %s50
      %s67 = sphi 0, %s51
      %s75 = sphi 0, %s77
      %s78 = sphi 0, %s75
      %s79 = sphi 0, %s78
      %s95 = sphi 0, %s79
      %s101 = sphi 0, %s103
      %s104 = sphi 0, %s101
      %s105 = sphi 0, %s104
      %s121 = sphi 0, %s105
      %s129 = sphi 0, %s131
      %s132 = sphi 0, %s129
      %s133 = sphi 0, %s132
      %s149 = sphi 0, %s133
    $region4: #{tpu_custom_call.1} parent=1 // loop_header_branch
      %19 = sbr.rel (%p17) target = $region8
    $region5: #{tpu_custom_call.1} parent=1 // loop_body
      %s21 = ssub.s32 %s16, 1
      %s22 = ssub.s32 %s16, 2
      %s32 = sadd.s32 1, %s25
      %p33 = scmp.ge.s32.totalorder %s32, 1
      %s34 = scalar_select %p33, 0, %s32
      %s35 = sadd.s32 1, %s24
      %s36 = scalar_select %p33, %s35, %s24
      %p37 = scmp.ge.s32.totalorder %s36, 1
      %s38 = scalar_select %p37, 0, %s36
      %s39 = sadd.s32 1, %s23
      %s40 = scalar_select %p37, %s39, %s23
      %p41 = scmp.ge.s32.totalorder %s40, 2
      %s42 = scalar_select %p41, 0, %s40
      %s43 = ssub.s32 %s23, %s42
      %s44 = ssub.s32 %s25, %s34
      %s45 = sor.u32 %s43, %s44
      %p46 = scmp.eq.s32.totalorder %s45, 0
      %s48 = sadd.s32 %s47, 1
      %s49 = scalar_select %p46, %s47, %s48
      %p52 = pneg %p46
      %p53 = scmp.eq.s32.totalorder %s16, 1
      %p54 = por %p52, %p53
      %p55 = scmp.ne.s32.totalorder %s47, %s50
      %p56 = scmp.eq.s32.totalorder %s16, 0
      %p57 = por %p55, %p56
      %p58 = scmp.ne.s32.totalorder %s47, %s50
      %p59 = scmp.eq.s32.totalorder %s21, 1
      %p60 = por %p58, %p59
      %p61 = scmp.ne.s32.totalorder %s50, %s51
      %p62 = scmp.eq.s32.totalorder %s21, 0
      %p63 = por %p61, %p62
      %p64 = scmp.ne.s32.totalorder %s50, %s51
      %p65 = scmp.eq.s32.totalorder %s22, 1
      %p66 = por %p64, %p65
      %p68 = scmp.ne.s32.totalorder %s51, %s67
      %p69 = scmp.eq.s32.totalorder %s22, 0
      %p70 = por %p68, %p69
      %s71 = ssub.s32 %s25, %s34
      %s72 = ssub.s32 %s24, %s38
      %s73 = sor.u32 %s71, %s72
      %p74 = scmp.eq.s32.totalorder %s73, 0
      %s76 = sadd.s32 %s75, 1
      %s77 = scalar_select %p74, %s75, %s76
      %p80 = pneg %p74
      %p81 = scmp.eq.s32.totalorder %s16, 1
      %p82 = por %p80, %p81
      %p83 = scmp.ne.s32.totalorder %s75, %s78
      %p84 = scmp.eq.s32.totalorder %s16, 0
      %p85 = por %p83, %p84
      %p86 = scmp.ne.s32.totalorder %s75, %s78
      %p87 = scmp.eq.s32.totalorder %s21, 1
      %p88 = por %p86, %p87
      %p89 = scmp.ne.s32.totalorder %s78, %s79
      %p90 = scmp.eq.s32.totalorder %s21, 0
      %p91 = por %p89, %p90
      %p92 = scmp.ne.s32.totalorder %s78, %s79
      %p93 = scmp.eq.s32.totalorder %s22, 1
      %p94 = por %p92, %p93
      %p96 = scmp.ne.s32.totalorder %s79, %s95
      %p97 = scmp.eq.s32.totalorder %s22, 0
      %p98 = por %p96, %p97
      %s99 = ssub.s32 %s24, %s38
      %p100 = scmp.eq.s32.totalorder %s99, 0
      %s102 = sadd.s32 %s101, 1
      %s103 = scalar_select %p100, %s101, %s102
      %p106 = pneg %p100
      %p107 = scmp.eq.s32.totalorder %s16, 1
      %p108 = por %p106, %p107
      %p109 = scmp.ne.s32.totalorder %s101, %s104
      %p110 = scmp.eq.s32.totalorder %s16, 0
      %p111 = por %p109, %p110
      %p112 = scmp.ne.s32.totalorder %s101, %s104
      %p113 = scmp.eq.s32.totalorder %s21, 1
      %p114 = por %p112, %p113
      %p115 = scmp.ne.s32.totalorder %s104, %s105
      %p116 = scmp.eq.s32.totalorder %s21, 0
      %p117 = por %p115, %p116
      %p118 = scmp.ne.s32.totalorder %s104, %s105
      %p119 = scmp.eq.s32.totalorder %s22, 1
      %p120 = por %p118, %p119
      %p122 = scmp.ne.s32.totalorder %s105, %s121
      %p123 = scmp.eq.s32.totalorder %s22, 0
      %p124 = por %p122, %p123
      %s125 = ssub.s32 %s23, %s42
      %s126 = ssub.s32 %s24, %s38
      %s127 = sor.u32 %s125, %s126
      %p128 = scmp.eq.s32.totalorder %s127, 0
      %s130 = sadd.s32 %s129, 1
      %s131 = scalar_select %p128, %s129, %s130
      %p134 = pneg %p128
      %p135 = scmp.eq.s32.totalorder %s16, 1
      %p136 = por %p134, %p135
      %p137 = scmp.ne.s32.totalorder %s129, %s132
      %p138 = scmp.eq.s32.totalorder %s16, 0
      %p139 = por %p137, %p138
      %p140 = scmp.ne.s32.totalorder %s129, %s132
      %p141 = scmp.eq.s32.totalorder %s21, 1
      %p142 = por %p140, %p141
      %p143 = scmp.ne.s32.totalorder %s132, %s133
      %p144 = scmp.eq.s32.totalorder %s21, 0
      %p145 = por %p143, %p144
      %p146 = scmp.ne.s32.totalorder %s132, %s133
      %p147 = scmp.eq.s32.totalorder %s22, 1
      %p148 = por %p146, %p147
      %p150 = scmp.ne.s32.totalorder %s133, %s149
      %p151 = scmp.eq.s32.totalorder %s22, 0
      %p152 = por %p150, %p151
      %p153 = scmp.le.s32.totalorder 1, %s16
      %p154 = scmp.lt.s32.totalorder %s16, 3
      %p155 = pnand %p153, %p154
      %p156 = pneg %p155
      // Predicated region
      $region9: #{tpu_custom_call.1} parent=5 // pred_check
        _
      $region10: #{tpu_custom_call.1} parent=5 // pred_check_branch
        %158 = sbr.rel (%p155) target = $region12
      $region11: #{tpu_custom_call.1} parent=5 // pred_region
        %s159 = ssub.s32 %s16, 1
        // Predicated region
        $region13: #{tpu_custom_call.1} parent=11 // pred_check
          %p160 = pneg %p91
        $region14: #{tpu_custom_call.1} parent=11 // pred_check_branch
          %162 = sbr.rel (%p160) target = $region16
        $region15: #{tpu_custom_call.1} parent=11 // pred_region
          %s163 = smul.u32 16, %s28
          %s164 = smul.u32 3, %s27
          %s166 = ssub.s32 6144, 6144
          %167 = vsyncadd [#allocation6], %s166
          %s168 = smul.addr %s163, 3
          %s169 = sadd.s32 %s164, %s168
          %s170 = smul.addr %s169, 128
          %s171 = scalar_lea.hbm %s1, %s170
          %s172 = sshll.u32 [#allocation5], 4
          %s173 = int_to_ptr.vmem [resolvable:$true] %s172
          %178 = dma.hbm_to_vmem [thread:$0]  %s171, 6144, %s173, [#allocation6], 384, 384, 24
        $region16: #{tpu_custom_call.1} parent=11 // pred_fallthru
          _
        // Predicated region
        $region17: #{tpu_custom_call.1} parent=11 // pred_check
          %p179 = pneg %p117
        $region18: #{tpu_custom_call.1} parent=11 // pred_check_branch
          %181 = sbr.rel (%p179) target = $region20
        $region19: #{tpu_custom_call.1} parent=11 // pred_region
          %s182 = smul.u32 3, %s27
          %p183 = scmp.lt.s32.totalorder %s182, 2
          %s184 = scalar_select %p183, %s182, 2
          %s185 = scalar_lea.vmem %s2, %s184
          %s186 = smul.u32 3, %s27
        $region20: #{tpu_custom_call.1} parent=11 // pred_fallthru
          _
      $region12: #{tpu_custom_call.1} parent=5 // pred_fallthru
        _
      %p187 = scmp.lt.s32.totalorder %s16, 2
      // Predicated region
      $region21: #{tpu_custom_call.1} parent=5 // pred_check
        %p188 = pneg %p187
      $region22: #{tpu_custom_call.1} parent=5 // pred_check_branch
        %190 = sbr.rel (%p188) target = $region24
      $region23: #{tpu_custom_call.1} parent=5 // pred_region
        // Predicated region
        $region25: #{tpu_custom_call.1} parent=23 // pred_check
          %p191 = pneg %p57
        $region26: #{tpu_custom_call.1} parent=23 // pred_check_branch
          %193 = sbr.rel (%p191) target = $region28
        $region27: #{tpu_custom_call.1} parent=23 // pred_region
          %s194 = sand.u32 %s47, 1
          %s195 = scalar_lea.sflag [#allocation3], %s194
          %s196 = sand.u32 %s47, 1
          %s197 = smul.addr %s196, 16
          %s198 = scalar_lea.vmem [#allocation2], %s197
          %s199 = smul.u32 2, %s23
          %s201 = ssub.s32 256, 256
          %202 = vsyncadd %s195, %s201
          %s203 = sadd.s32 %s25, %s199
          %s204 = smul.addr %s203, 128
          %s205 = scalar_lea.hbm %s0, %s204
          %s206 = sshll.u32 %s198, 4
          %s207 = int_to_ptr.vmem [resolvable:$true] %s206
          %212 = dma.hbm_to_vmem [thread:$0]  %s205, 256, %s207, %s195, 128, 128, 8
        $region28: #{tpu_custom_call.1} parent=23 // pred_fallthru
          _
      $region24: #{tpu_custom_call.1} parent=5 // pred_fallthru
        _
      %p213 = scmp.le.s32.totalorder 1, %s16
      %p214 = scmp.lt.s32.totalorder %s16, 3
      %p215 = pnand %p213, %p214
      %p216 = pneg %p215
      // Predicated region
      $region29: #{tpu_custom_call.1} parent=5 // pred_check
        _
      $region30: #{tpu_custom_call.1} parent=5 // pred_check_branch
        %218 = sbr.rel (%p215) target = $region32
      $region31: #{tpu_custom_call.1} parent=5 // pred_region
        %s219 = ssub.s32 %s16, 1
        %s220 = sand.u32 %s50, 1
        %s221 = scalar_lea.sflag [#allocation3], %s220
        %s222 = sand.u32 %s50, 1
        %s223 = smul.addr %s222, 16
        %s224 = scalar_lea.vmem [#allocation2], %s223
        // Predicated region
        $region33: #{tpu_custom_call.1} parent=31 // pred_check
          %p225 = pneg %p63
        $region34: #{tpu_custom_call.1} parent=31 // pred_check_branch
          %227 = sbr.rel (%p225) target = $region36
        $region35: #{tpu_custom_call.1} parent=31 // pred_region
          %228 = dma.done %s221, 256
        $region36: #{tpu_custom_call.1} parent=31 // pred_fallthru
          _
        // Predicated region
        $region37: #{tpu_custom_call.1} parent=31 // pred_check
          %p229 = pneg %p91
        $region38: #{tpu_custom_call.1} parent=31 // pred_check_branch
          %231 = sbr.rel (%p229) target = $region40
        $region39: #{tpu_custom_call.1} parent=31 // pred_region
          %232 = dma.done [#allocation6], 6144
        $region40: #{tpu_custom_call.1} parent=31 // pred_fallthru
          _
        %s233 = sand.u32 %s50, 1
        %s234 = scalar_lea.sflag [#allocation3], %s233
        %s235 = sand.u32 %s50, 1
        %s236 = smul.addr %s235, 16
        %s237 = scalar_lea.vmem [#allocation2], %s236
        %p238 = pneg %p63
        %p239 = pneg %p60
        %p240 = pneg %p91
        %p241 = pneg %p88
        %s242 = smul.u32 3, %s27
        %p243 = scmp.lt.s32.totalorder %s242, 2
        %s244 = scalar_select %p243, %s242, 2
        %s245 = scalar_lea.vmem %s2, %s244
        %p246 = pneg %p117
        %p247 = pneg %p114
        %p248 = pneg %p145
        %p249 = pneg %p142
        %s250 = sand.u32 %s132, 1
        %s251 = scalar_lea.sflag [#allocation4], %s250
        %s252 = sand.u32 %s132, 1
        %s253 = smul.addr %s252, 48
        %s254 = scalar_lea.vmem [#allocation7], %s253
        %s255 = smul.u32 2, %s26
        %s256 = smul.u32 16, %s28
        %s257 = smul.u32 3, %s27
        %s258 = smul.u32 3, %s27
        %p259 = scmp.lt.s32.totalorder %s258, 2
        %s260 = scalar_select %p259, %s258, 2
        %s261 = scalar_lea.vmem %s2, %s260
        %s262 = smul.u32 3, %s27
        %s263 = smul.u32 2, %s26
        %s264 = smul.u32 3, %s27
        %p265 = scmp.eq.s32.totalorder %s28, 0
        // Predicated region
        $region41: #{tpu_custom_call.1} parent=31 // pred_check
          %p266 = pneg %p265
        $region42: #{tpu_custom_call.1} parent=31 // pred_check_branch
          %268 = sbr.rel (%p266) target = $region44
        $region43: #{tpu_custom_call.1} parent=31 // pred_region
          %v269 = vld [vmem:[%s261] sm:$0x7]
          %v271 = vlaneseq
          %v272 = vshrl.u32 %v271, 7
          %v273 = vsub.s32 0, %v272
          %v274 = vrot.slane %v269, %v273
          %v275 = vlaneseq
          %v276 = vshrl.u32 %v275, 7
          %v277 = vsub.s32 1, %v276
          %v278 = vrot.slane %v269, %v277
          %v279 = vlaneseq
          %v280 = vshrl.u32 %v279, 7
          %v281 = vsub.s32 2, %v280
          %v282 = vrot.slane %v269, %v281
          %286 = vst [vmem:[%s254] sm:$0xff] %v274
          %287 = vst [vmem:[%s254 + $0x8] sm:$0xff] %v278
          %288 = vst [vmem:[%s254 + $0x10] sm:$0xff] %v282
          %289 = vst [vmem:[%s254 + $0x18] sm:$0xff] %v274
          %290 = vst [vmem:[%s254 + $0x20] sm:$0xff] %v278
          %291 = vst [vmem:[%s254 + $0x28] sm:$0xff] %v282
        $region44: #{tpu_custom_call.1} parent=31 // pred_fallthru
          _
        %v292 = vld [vmem:[%s254] sm:$0xff]
        %v293 = vld [vmem:[%s254 + $0x8] sm:$0xff]
        %v294 = vld [vmem:[%s254 + $0x10] sm:$0xff]
        %v295 = vld [vmem:[%s254 + $0x18] sm:$0xff]
        %v296 = vld [vmem:[%s254 + $0x20] sm:$0xff]
        %v297 = vld [vmem:[%s254 + $0x28] sm:$0xff]
        %v298 = vld [vmem:[%s224] sm:$0xff]
        %v299 = vld [vmem:[%s224 + $0x8] sm:$0xff]
        %v300 = vld [vmem:[#allocation5] sm:$0xff]
        %v301 = vld [vmem:[#allocation5 + $0x8] sm:$0xff]
        %v302 = vld [vmem:[#allocation5 + $0x10] sm:$0xff]
        %v303 = vld [vmem:[#allocation5 + $0x18] sm:$0xff]
        %v304 = vld [vmem:[#allocation5 + $0x20] sm:$0xff]
        %v305 = vld [vmem:[#allocation5 + $0x28] sm:$0xff]
        %v306 = vld [vmem:[#allocation5 + $0x30] sm:$0xff]
        %v307 = vld [vmem:[#allocation5 + $0x38] sm:$0xff]
        %v308 = vld [vmem:[#allocation5 + $0x40] sm:$0xff]
        %v309 = vld [vmem:[#allocation5 + $0x48] sm:$0xff]
        %v310 = vld [vmem:[#allocation5 + $0x50] sm:$0xff]
        %v311 = vld [vmem:[#allocation5 + $0x58] sm:$0xff]
        %v312 = vld [vmem:[#allocation5 + $0x60] sm:$0xff]
        %v313 = vld [vmem:[#allocation5 + $0x68] sm:$0xff]
        %v314 = vld [vmem:[#allocation5 + $0x70] sm:$0xff]
        %v315 = vld [vmem:[#allocation5 + $0x78] sm:$0xff]
        %v316 = vld [vmem:[#allocation5 + $0x80] sm:$0xff]
        %v317 = vld [vmem:[#allocation5 + $0x88] sm:$0xff]
        %v318 = vld [vmem:[#allocation5 + $0x90] sm:$0xff]
        %v319 = vld [vmem:[#allocation5 + $0x98] sm:$0xff]
        %v320 = vld [vmem:[#allocation5 + $0xa0] sm:$0xff]
        %v321 = vld [vmem:[#allocation5 + $0xa8] sm:$0xff]
        %v322 = vld [vmem:[#allocation5 + $0xb0] sm:$0xff]
        %v323 = vld [vmem:[#allocation5 + $0xb8] sm:$0xff]
        %v324 = vld [vmem:[#allocation5 + $0xc0] sm:$0xff]
        %v325 = vld [vmem:[#allocation5 + $0xc8] sm:$0xff]
        %v326 = vld [vmem:[#allocation5 + $0xd0] sm:$0xff]
        %v327 = vld [vmem:[#allocation5 + $0xd8] sm:$0xff]
        %v328 = vld [vmem:[#allocation5 + $0xe0] sm:$0xff]
        %v329 = vld [vmem:[#allocation5 + $0xe8] sm:$0xff]
        %v330 = vld [vmem:[#allocation5 + $0xf0] sm:$0xff]
        %v331 = vld [vmem:[#allocation5 + $0xf8] sm:$0xff]
        %v332 = vld [vmem:[#allocation5 + $0x100] sm:$0xff]
        %v333 = vld [vmem:[#allocation5 + $0x108] sm:$0xff]
        %v334 = vld [vmem:[#allocation5 + $0x110] sm:$0xff]
        %v335 = vld [vmem:[#allocation5 + $0x118] sm:$0xff]
        %v336 = vld [vmem:[#allocation5 + $0x120] sm:$0xff]
        %v337 = vld [vmem:[#allocation5 + $0x128] sm:$0xff]
        %v338 = vld [vmem:[#allocation5 + $0x130] sm:$0xff]
        %v339 = vld [vmem:[#allocation5 + $0x138] sm:$0xff]
        %v340 = vld [vmem:[#allocation5 + $0x140] sm:$0xff]
        %v341 = vld [vmem:[#allocation5 + $0x148] sm:$0xff]
        %v342 = vld [vmem:[#allocation5 + $0x150] sm:$0xff]
        %v343 = vld [vmem:[#allocation5 + $0x158] sm:$0xff]
        %v344 = vld [vmem:[#allocation5 + $0x160] sm:$0xff]
        %v345 = vld [vmem:[#allocation5 + $0x168] sm:$0xff]
        %v346 = vld [vmem:[#allocation5 + $0x170] sm:$0xff]
        %v347 = vld [vmem:[#allocation5 + $0x178] sm:$0xff]
        %348 = vmatprep.subr.mxu0 %v346
        %349 = vmatpush1.msra.mxu0 %v345
        %350 = vmatprep.subr.mxu0 %v343
        %351 = vmatpush1.msra.mxu0 %v342
        %352 = vmatprep.subr.mxu0 %v340
        %353 = vmatpush1.msra.mxu0 %v339
        %354 = vmatprep.subr.mxu0 %v337
        %355 = vmatpush1.msra.mxu0 %v336
        %356 = vmatprep.subr.mxu0 %v334
        %357 = vmatpush1.msra.mxu0 %v333
        %358 = vmatprep.subr.mxu0 %v331
        %359 = vmatpush1.msra.mxu0 %v330
        %360 = vmatprep.subr.mxu0 %v328
        %361 = vmatpush1.msra.mxu0 %v327
        %362 = vmatprep.subr.mxu0 %v325
        %363 = vmatpush1.msra.mxu0 %v324
        %364 = vmatprep.subr.mxu0 %v322
        %365 = vmatpush1.msra.mxu0 %v321
        %366 = vmatprep.subr.mxu0 %v319
        %367 = vmatpush1.msra.mxu0 %v318
        %368 = vmatprep.subr.mxu0 %v316
        %369 = vmatpush1.msra.mxu0 %v315
        %370 = vmatprep.subr.mxu0 %v313
        %371 = vmatpush1.msra.mxu0 %v312
        %372 = vmatprep.subr.mxu0 %v310
        %373 = vmatpush1.msra.mxu0 %v309
        %374 = vmatprep.subr.mxu0 %v307
        %375 = vmatpush1.msra.mxu0 %v306
        %376 = vmatprep.subr.mxu0 %v304
        %377 = vmatpush1.msra.mxu0 %v303
        %378 = vmatprep.subr.mxu0 %v301
        %379 = vmatpush1.msra.mxu0 %v300
        %380 = vmatprep.subr.mxu0 0.0
        %381 = vmatpush2.msra.mxu0 0.0
        %382 = vmatprep.subr.mxu0 0.0
        %383 = vmatpush2.msra.mxu0 0.0
        %384 = vmatprep.subr.mxu0 0.0
        %385 = vmatpush2.msra.mxu0 0.0
        %386 = vmatprep.subr.mxu0 0.0
        %387 = vmatpush2.msra.mxu0 0.0
        %388 = vmatprep.subr.mxu0 0.0
        %389 = vmatpush2.msra.mxu0 0.0
        %390 = vmatprep.subr.mxu0 0.0
        %391 = vmatpush2.msra.mxu0 0.0
        %392 = vmatprep.subr.mxu0 0.0
        %393 = vmatpush2.msra.mxu0 0.0
        %394 = vmatprep.subr.mxu0 0.0
        %395 = vmatpush2.msra.mxu0 0.0
        %396 = vmatprep.subr.mxu0 0.0
        %397 = vmatpush2.msra.mxu0 0.0
        %398 = vmatprep.subr.mxu0 0.0
        %399 = vmatpush2.msra.mxu0 0.0
        %400 = vmatprep.subr.mxu0 0.0
        %401 = vmatpush2.msra.mxu0 0.0
        %402 = vmatprep.subr.mxu0 0.0
        %403 = vmatpush2.msra.mxu0 0.0
        %404 = vmatprep.subr.mxu0 0.0
        %405 = vmatpush2.msra.mxu0 0.0
        %406 = vmatprep.subr.mxu0 0.0
        %407 = vmatpush2.msra.mxu0 0.0
        %408 = vmatprep.subr.mxu0 0.0
        %409 = vmatpush2.msra.mxu0 0.0
        %410 = vmatprep.subr.mxu0 0.0
        %411 = vmatpush2.msra.mxu0 0.0
        %412 = vmatprep.mubr.f32.mxu0 0.0
        %413 = vmatmul.mubr.f32.gmra.mxu0 %v298
        %v414 = vpop.f32.mrf.mxu0
        %v415 = vadd.f32 0.0, %v414
        %v416 = vpop.f32.mrf.mxu0
        %v417 = vadd.f32 0.0, %v416
        %418 = vmatprep.mubr.f32.mxu0 0.0
        %419 = vmatmul.mubr.f32.gmra.mxu0 %v299
        %v420 = vpop.f32.mrf.mxu0
        %v421 = vadd.f32 0.0, %v420
        %v422 = vpop.f32.mrf.mxu0
        %v423 = vadd.f32 0.0, %v422
        %424 = vdwg.mxu0
        %425 = vmatprep.subr.mxu0 0.0
        %426 = vmatpush1.msra.mxu0 %v347
        %427 = vmatprep.subr.mxu0 0.0
        %428 = vmatpush1.msra.mxu0 %v344
        %429 = vmatprep.subr.mxu0 0.0
        %430 = vmatpush1.msra.mxu0 %v341
        %431 = vmatprep.subr.mxu0 0.0
        %432 = vmatpush1.msra.mxu0 %v338
        %433 = vmatprep.subr.mxu0 0.0
        %434 = vmatpush1.msra.mxu0 %v335
        %435 = vmatprep.subr.mxu0 0.0
        %436 = vmatpush1.msra.mxu0 %v332
        %437 = vmatprep.subr.mxu0 0.0
        %438 = vmatpush1.msra.mxu0 %v329
        %439 = vmatprep.subr.mxu0 0.0
        %440 = vmatpush1.msra.mxu0 %v326
        %441 = vmatprep.subr.mxu0 0.0
        %442 = vmatpush1.msra.mxu0 %v323
        %443 = vmatprep.subr.mxu0 0.0
        %444 = vmatpush1.msra.mxu0 %v320
        %445 = vmatprep.subr.mxu0 0.0
        %446 = vmatpush1.msra.mxu0 %v317
        %447 = vmatprep.subr.mxu0 0.0
        %448 = vmatpush1.msra.mxu0 %v314
        %449 = vmatprep.subr.mxu0 0.0
        %450 = vmatpush1.msra.mxu0 %v311
        %451 = vmatprep.subr.mxu0 0.0
        %452 = vmatpush1.msra.mxu0 %v308
        %453 = vmatprep.subr.mxu0 0.0
        %454 = vmatpush1.msra.mxu0 %v305
        %455 = vmatprep.subr.mxu0 0.0
        %456 = vmatpush1.msra.mxu0 %v302
        %457 = vmatprep.subr.mxu0 0.0
        %458 = vmatpush2.msra.mxu0 0.0
        %459 = vmatprep.subr.mxu0 0.0
        %460 = vmatpush2.msra.mxu0 0.0
        %461 = vmatprep.subr.mxu0 0.0
        %462 = vmatpush2.msra.mxu0 0.0
        %463 = vmatprep.subr.mxu0 0.0
        %464 = vmatpush2.msra.mxu0 0.0
        %465 = vmatprep.subr.mxu0 0.0
        %466 = vmatpush2.msra.mxu0 0.0
        %467 = vmatprep.subr.mxu0 0.0
        %468 = vmatpush2.msra.mxu0 0.0
        %469 = vmatprep.subr.mxu0 0.0
        %470 = vmatpush2.msra.mxu0 0.0
        %471 = vmatprep.subr.mxu0 0.0
        %472 = vmatpush2.msra.mxu0 0.0
        %473 = vmatprep.subr.mxu0 0.0
        %474 = vmatpush2.msra.mxu0 0.0
        %475 = vmatprep.subr.mxu0 0.0
        %476 = vmatpush2.msra.mxu0 0.0
        %477 = vmatprep.subr.mxu0 0.0
        %478 = vmatpush2.msra.mxu0 0.0
        %479 = vmatprep.subr.mxu0 0.0
        %480 = vmatpush2.msra.mxu0 0.0
        %481 = vmatprep.subr.mxu0 0.0
        %482 = vmatpush2.msra.mxu0 0.0
        %483 = vmatprep.subr.mxu0 0.0
        %484 = vmatpush2.msra.mxu0 0.0
        %485 = vmatprep.subr.mxu0 0.0
        %486 = vmatpush2.msra.mxu0 0.0
        %487 = vmatprep.subr.mxu0 0.0
        %488 = vmatpush2.msra.mxu0 0.0
        %489 = vmatprep.mubr.f32.mxu0 0.0
        %490 = vmatmul.mubr.f32.gmra.mxu0 %v298
        %v491 = vpop.f32.mrf.mxu0
        %v492 = vadd.f32 0.0, %v491
        %v493 = vpop.f32.mrf.mxu0
        %494 = vmatprep.mubr.f32.mxu0 0.0
        %495 = vmatmul.mubr.f32.gmra.mxu0 %v299
        %v496 = vpop.f32.mrf.mxu0
        %v497 = vadd.f32 0.0, %v496
        %v498 = vpop.f32.mrf.mxu0
        %499 = vdwg.mxu0
        %v500 = vadd.f32 %v292, %v415
        %v501 = vadd.f32 %v293, %v417
        %v502 = vadd.f32 %v294, %v492
        %v503 = vadd.f32 %v295, %v421
        %v504 = vadd.f32 %v296, %v423
        %v505 = vadd.f32 %v297, %v497
        %506 = vst [vmem:[%s254] sm:$0xff] %v500
        %507 = vst [vmem:[%s254 + $0x8] sm:$0xff] %v501
        %508 = vst [vmem:[%s254 + $0x10] sm:$0xff] %v502
        %509 = vst [vmem:[%s254 + $0x18] sm:$0xff] %v503
        %510 = vst [vmem:[%s254 + $0x20] sm:$0xff] %v504
        %511 = vst [vmem:[%s254 + $0x28] sm:$0xff] %v505
        %s512 = sand.u32 %s132, 1
        %s513 = scalar_lea.sflag [#allocation4], %s512
        %s514 = sand.u32 %s132, 1
        %s515 = smul.addr %s514, 48
        %s516 = scalar_lea.vmem [#allocation7], %s515
        // Predicated region
        $region45: #{tpu_custom_call.1} parent=31 // pred_check
          %p517 = pneg %p142
        $region46: #{tpu_custom_call.1} parent=31 // pred_check_branch
          %519 = sbr.rel (%p517) target = $region48
        $region47: #{tpu_custom_call.1} parent=31 // pred_region
          %s520 = smul.u32 2, %s26
          %s521 = smul.u32 3, %s27
          %s523 = ssub.s32 768, 768
          %524 = vsyncadd %s513, %s523
          %s525 = smul.addr %s520, 3
          %s526 = sadd.s32 %s521, %s525
          %s527 = smul.addr %s526, 128
          %s528 = scalar_lea.hbm %s3, %s527
          %s529 = sshll.u32 %s516, 4
          %s530 = int_to_ptr.vmem [resolvable:$true] %s529
          %535 = dma.vmem_to_hbm [thread:$0]  %s530, 768, %s528, %s513, 384, 384, 24
        $region48: #{tpu_custom_call.1} parent=31 // pred_fallthru
          _
      $region32: #{tpu_custom_call.1} parent=5 // pred_fallthru
        _
      %p536 = scmp.le.s32.totalorder 2, %s16
      // Predicated region
      $region49: #{tpu_custom_call.1} parent=5 // pred_check
        %p537 = pneg %p536
      $region50: #{tpu_custom_call.1} parent=5 // pred_check_branch
        %539 = sbr.rel (%p537) target = $region52
      $region51: #{tpu_custom_call.1} parent=5 // pred_region
        %s540 = ssub.s32 %s16, 2
        // Predicated region
        $region53: #{tpu_custom_call.1} parent=51 // pred_check
          %p541 = pneg %p148
        $region54: #{tpu_custom_call.1} parent=51 // pred_check_branch
          %543 = sbr.rel (%p541) target = $region56
        $region55: #{tpu_custom_call.1} parent=51 // pred_region
          %s544 = sand.u32 %s133, 1
          %s545 = scalar_lea.sflag [#allocation4], %s544
          %s546 = sand.u32 %s133, 1
          %s547 = smul.addr %s546, 48
          %s548 = scalar_lea.vmem [#allocation7], %s547
          %549 = dma.done %s545, 768
        $region56: #{tpu_custom_call.1} parent=51 // pred_fallthru
          _
      $region52: #{tpu_custom_call.1} parent=5 // pred_fallthru
        _
    $region6: #{tpu_custom_call.1} parent=1 // loop_footer
      %s20 = sadd.s32 1, %s16
    $region7: #{tpu_custom_call.1} parent=1 // loop_footer_branch
      %15 = sbr.rel target = $region3
    $region8: #{tpu_custom_call.1} parent=1 // loop_exit
      _
    %550 = vsyncpa [#allocation3], 1
    %s551 = scalar_lea.sflag [#allocation3], 1
    %552 = vsyncpa %s551, 1
    %553 = vsyncpa [#allocation6], 1
    %554 = vsyncpa [#allocation4], 1
    %s555 = scalar_lea.sflag [#allocation4], 1
    %556 = vsyncpa %s555, 1

</llo_original>
